<compile_context>
chip_gen: v7x
topology: tpu7x:2x2x1
jax: 0.10.0
libtpu: 0.0.40
codegen_flags: <defaults>
</compile_context>

<pallas_src>
import functools

import jax
import jax.numpy as jnp
import numpy as np
from jax.experimental import pallas as pl
from jax.experimental.pallas import tpu as pltpu

K = 7   # kernel size
P = 3   # padding


# ---------------------------------------------------------------------------
# Kernel
# ---------------------------------------------------------------------------
def _spatial_attention_kernel(x_ref, ba_ref, bm_ref, o_ref, *,
                              inv_c, bn_shift, gate_dtype):
    """x_ref : (nt, C, HWp)  input block, lane-dense spatial axis.
    ba_ref : (HWp, HWp)     banded conv matrix for the avg descriptor (f32,
                            boundary masks + folded BN scale baked in).
    bm_ref : (HWp, HWp)     banded conv matrix for the max descriptor.
    o_ref  : (nt, C, HWp)   output block (input dtype).
    """
    xs = x_ref[...]                                            # native dtype

    # Channel descriptors: accumulate the mean in f32 inside the reduce (no
    # full-block f32 copy); max stays in the input dtype until the matmul.
    avg = jnp.sum(xs, axis=1, dtype=jnp.float32) * inv_c       # (nt, HWp) f32
    mx = jnp.max(xs, axis=1).astype(jnp.float32)               # (nt, HWp) f32

    # 7x7 conv + folded BatchNorm scale as MXU matmuls; add the folded shift.
    y = (jnp.dot(avg, ba_ref[...], preferred_element_type=jnp.float32)
         + jnp.dot(mx, bm_ref[...], preferred_element_type=jnp.float32)
         + bn_shift)                                           # (nt, HWp) f32

    # sigmoid(y) = 0.5 * tanh(0.5 * y) + 0.5 -- one EUP op, rides a free slot.
    gate = 0.5 * jnp.tanh(0.5 * y) + 0.5                       # (nt, HWp) f32

    # Gating multiply in the cheapest safe dtype for this chip generation.
    g = gate.astype(gate_dtype)[:, None, :]
    o_ref[...] = (xs.astype(gate_dtype) * g).astype(o_ref.dtype)


# ---------------------------------------------------------------------------
# Host-side helpers
# ---------------------------------------------------------------------------
def _build_conv_matrices(conv_w, bn_scale, H, W, HWp):
    """Banded (HWp, HWp) matrices B with conv(desc)[p] = sum_s desc[s] * B[s, p].
    Out-of-image taps are dropped (zero rows/cols) and the folded BN scale is
    premultiplied into the coefficients."""
    w = np.asarray(conv_w, dtype=np.float64).reshape(2, K, K) * float(bn_scale)
    HW = H * W
    ba = np.zeros((HWp, HWp), np.float32)
    bm = np.zeros((HWp, HWp), np.float32)
    for p in range(HW):
        r, c = divmod(p, W)
        for i in range(K):
            rr = r + i - P
            if rr < 0 or rr >= H:
                continue
            row_base = rr * W
            for j in range(K):
                cc = c + j - P
                if cc < 0 or cc >= W:
                    continue
                s = row_base + cc
                ba[s, p] += w[0, i, j]
                bm[s, p] += w[1, i, j]
    return jnp.asarray(ba), jnp.asarray(bm)


def _device_kind():
    try:
        return jax.devices()[0].device_kind.lower()
    except Exception:
        return ""


def _chip_traits():
    kind = _device_kind()
    is_v7 = ("v7" in kind) or ("7x" in kind)
    # Chips exposing two TensorCores to a single Pallas program.
    two_tc = is_v7 or ("v4" in kind) or ("v5p" in kind)
    # Native bf16 VPU path (v6e / v7x).
    bf16_valu = is_v7 or ("v6" in kind)
    return is_v7, two_tc, bf16_valu


def _choose_batch_tile(n, per_elem_bytes, budget_bytes, two_tc,
                       min_block_bytes=1 << 20):
    """Largest divisor of n whose padded (nt, C, HWp) block fits the budget."""
    nt = 1
    for d in range(1, n + 1):
        if n % d == 0 and d * per_elem_bytes <= budget_bytes:
            nt = d
    # Split a single-step grid only when there are two TensorCores to feed and
    # the halves stay large enough to amortize the ~0.35 us per-step overhead.
    if nt == n and n >= 2 and two_tc:
        for d in range(n // 2, 0, -1):
            if n % d == 0 and d * per_elem_bytes >= min_block_bytes:
                nt = d
                break
    return nt


# ---------------------------------------------------------------------------
# Wrapper
# ---------------------------------------------------------------------------
def spatial_attention(x, conv_w, bn_gamma, bn_beta, bn_mean, bn_var, eps=1e-5,
                      block_budget_bytes=None):
    """x: (N, C, H, W).  conv_w: (1, 2, K, K) (PyTorch OIHW).  BN params: (1,)."""
    N, C, H, W = x.shape
    HW = H * W
    HWp = -(-HW // 128) * 128          # lane-dense spatial axis (mult. of 128)

    is_v7, two_tc, bf16_valu = _chip_traits()

    # Fold eval-mode BatchNorm into a scale (baked into the conv matrices) and
    # a shift (baked into the kernel as a constant).
    bn_scale = float(np.asarray(bn_gamma)[0]
                     / np.sqrt(np.asarray(bn_var)[0] + eps))
    bn_shift = float(np.asarray(bn_beta)[0] - np.asarray(bn_mean)[0] * bn_scale)

    ba, bm = _build_conv_matrices(conv_w, bn_scale, H, W, HWp)

    # Lane-dense layout: flatten spatial dims; pad the lane axis to 128 so the
    # big output store is unmasked (no-op when H*W is already a multiple).
    x_flat = x.reshape(N, C, HW)
    if HWp != HW:
        x_flat = jnp.pad(x_flat, ((0, 0), (0, 0), (0, HWp - HW)))

    # Real VMEM block size: C rounds up to the sublane tile for the dtype.
    itemsize = jnp.dtype(x.dtype).itemsize
    sublane = 8 * max(1, 4 // itemsize)              # f32:8, bf16:16, int8:32
    c_pad = -(-C // sublane) * sublane
    per_elem_bytes = c_pad * HWp * itemsize

    if block_budget_bytes is None:
        block_budget_bytes = (8 << 20) if is_v7 else (20 << 20)

    nt = _choose_batch_tile(N, per_elem_bytes, block_budget_bytes, two_tc)
    block_bytes = nt * per_elem_bytes
    grid = (N // nt,)

    # Gate-multiply dtype: bf16 where the VPU supports it, f32 otherwise.
    if x.dtype == jnp.bfloat16 and bf16_valu:
        gate_dtype = jnp.bfloat16
    else:
        gate_dtype = jnp.float32

    # VMEM accounting: double-buffered in/out blocks, resident conv matrices,
    # f32 intermediates (descriptors / conv output / gate), and a possible f32
    # upcast of the block when the chip forces an f32 gating multiply.
    conv_mat_bytes = 2 * HWp * HWp * 4
    inter_bytes = 8 * nt * HWp * 4
    upcast_bytes = (nt * c_pad * HWp * 4
                    if (gate_dtype == jnp.float32 and itemsize < 4) else 0)
    vmem_cap = (48 << 20) if is_v7 else (96 << 20)
    vmem_limit = int(min(vmem_cap,
                         max(16 << 20,
                             4 * block_bytes + 2 * conv_mat_bytes
                             + inter_bytes + upcast_bytes + (2 << 20))))

    kernel = functools.partial(_spatial_attention_kernel,
                               inv_c=1.0 / C, bn_shift=bn_shift,
                               gate_dtype=gate_dtype)

    out_flat = pl.pallas_call(
        kernel,
        out_shape=jax.ShapeDtypeStruct((N, C, HWp), x.dtype),
        grid=grid,
        in_specs=[
            pl.BlockSpec((nt, C, HWp), lambda n: (n, 0, 0)),
            pl.BlockSpec((HWp, HWp), lambda n: (0, 0)),   # resident constant
            pl.BlockSpec((HWp, HWp), lambda n: (0, 0)),   # resident constant
        ],
        out_specs=pl.BlockSpec((nt, C, HWp), lambda n: (n, 0, 0)),
        compiler_params=pltpu.CompilerParams(
            dimension_semantics=("parallel",),
            vmem_limit_bytes=vmem_limit),
    )(x_flat, ba, bm)

    return out_flat[..., :HW].reshape(N, C, H, W)


# ---------------------------------------------------------------------------
# Pure-JAX reference (PyTorch forward, BN in eval mode)
# ---------------------------------------------------------------------------
def spatial_attention_ref(x, conv_w, bn_gamma, bn_beta, bn_mean, bn_var, eps=1e-5):
    avg = jnp.mean(x, axis=1, keepdims=True)
    mx = jnp.max(x, axis=1, keepdims=True)
    stacked = jnp.concatenate([avg, mx], axis=1)           # (N, 2, H, W)
    out = jax.lax.conv_general_dilated(
        stacked, conv_w, window_strides=(1, 1), padding=((P, P), (P, P)),
        dimension_numbers=("NCHW", "OIHW", "NCHW"))
    out = (out - bn_mean.reshape(1, -1, 1, 1)) / jnp.sqrt(
        bn_var.reshape(1, -1, 1, 1) + eps)
    out = out * bn_gamma.reshape(1, -1, 1, 1) + bn_beta.reshape(1, -1, 1, 1)
    return x * jax.nn.sigmoid(out)


if __name__ == "__main__":
    N, C, H, W = 2, 4, 16, 16

    key = jax.random.PRNGKey(0)
    kx, kw = jax.random.split(key)
    x = jax.random.normal(kx, (N, C, H, W), dtype=jnp.float32)

    # Deterministic parameter init (shapes from the module __init__).
    conv_w = 0.1 * jax.random.normal(kw, (1, 2, K, K), dtype=jnp.float32)
    bn_gamma = jnp.ones((1,), jnp.float32)      # PyTorch default BN init
    bn_beta = jnp.zeros((1,), jnp.float32)
    bn_mean = jnp.zeros((1,), jnp.float32)      # running stats (eval mode)
    bn_var = jnp.ones((1,), jnp.float32)

    out = spatial_attention(x, conv_w, bn_gamma, bn_beta, bn_mean, bn_var)
    out = jax.block_until_ready(out)

    ref = spatial_attention_ref(x, conv_w, bn_gamma, bn_beta, bn_mean, bn_var)
    # Tolerance covers MXU multi-pass f32 matmul rounding and the EUP tanh.
    np.testing.assert_allclose(np.asarray(out), np.asarray(ref),
                               rtol=1e-3, atol=1e-3)

    print("KERNEL_OK")
</pallas_src>

<mosaic_0001>
module attributes {stable_mosaic.version = 11 : i64} {
  func.func @_spatial_attention_kernel(%arg0: i32, %arg1: memref<2x4x256xf32, #tpu.memory_space<vmem>>, %arg2: memref<256x256xf32, #tpu.memory_space<vmem>>, %arg3: memref<256x256xf32, #tpu.memory_space<vmem>>, %arg4: memref<2x4x256xf32, #tpu.memory_space<vmem>>) attributes {dimension_semantics = [#tpu.dimension_semantics<parallel>], iteration_bounds = array<i64: 1>, scalar_prefetch = 0 : i64, scratch_operands = 0 : i64, tpu.core_type = #tpu.core_type<tc>, window_params = [{transform_indices = @transform_0, window_bounds = array<i64: 2, 4, 256>}, {pipeline_mode = #tpu.pipeline_mode<synchronous>, transform_indices = @transform_1, window_bounds = array<i64: 256, 256>}, {pipeline_mode = #tpu.pipeline_mode<synchronous>, transform_indices = @transform_2, window_bounds = array<i64: 256, 256>}, {transform_indices = @transform_3, window_bounds = array<i64: 2, 4, 256>}]} {
    %c0 = arith.constant 0 : index
    %c0_0 = arith.constant 0 : index
    %c0_1 = arith.constant 0 : index
    %0 = vector.load %arg1[%c0, %c0_0, %c0_1] : memref<2x4x256xf32, #tpu.memory_space<vmem>>, vector<2x4x256xf32>
    %cst = arith.constant dense<0.000000e+00> : vector<2x256xf32>
    %1 = vector.multi_reduction <add>, %0, %cst [1] : vector<2x4x256xf32> to vector<2x256xf32>
    %cst_2 = arith.constant 2.500000e-01 : f32
    %2 = vector.broadcast %cst_2 : f32 to vector<2x256xf32>
    %3 = arith.mulf %1, %2 : vector<2x256xf32>
    %cst_3 = arith.constant dense<0xFF800000> : vector<2x256xf32>
    %4 = vector.multi_reduction <maximumf>, %0, %cst_3 [1] : vector<2x4x256xf32> to vector<2x256xf32>
    %c0_4 = arith.constant 0 : index
    %c0_5 = arith.constant 0 : index
    %5 = vector.load %arg2[%c0_4, %c0_5] : memref<256x256xf32, #tpu.memory_space<vmem>>, vector<256x256xf32>
    %cst_6 = arith.constant dense<0.000000e+00> : vector<2x256xf32>
    %6 = tpu.matmul %3, %5, %cst_6 {dimension_numbers = #tpu.dot_dimension_numbers<[1], [0], [0], [1], [0, 0, 1, 1], [], []>} : vector<2x256xf32>, vector<256x256xf32>, vector<2x256xf32> -> vector<2x256xf32>
    %c0_7 = arith.constant 0 : index
    %c0_8 = arith.constant 0 : index
    %7 = vector.load %arg3[%c0_7, %c0_8] : memref<256x256xf32, #tpu.memory_space<vmem>>, vector<256x256xf32>
    %cst_9 = arith.constant dense<0.000000e+00> : vector<2x256xf32>
    %8 = tpu.matmul %4, %7, %cst_9 {dimension_numbers = #tpu.dot_dimension_numbers<[1], [0], [0], [1], [0, 0, 1, 1], [], []>} : vector<2x256xf32>, vector<256x256xf32>, vector<2x256xf32> -> vector<2x256xf32>
    %9 = arith.addf %6, %8 : vector<2x256xf32>
    %cst_10 = arith.constant 0.000000e+00 : f32
    %10 = vector.broadcast %cst_10 : f32 to vector<2x256xf32>
    %11 = arith.addf %9, %10 : vector<2x256xf32>
    %cst_11 = arith.constant 5.000000e-01 : f32
    %12 = vector.broadcast %cst_11 : f32 to vector<2x256xf32>
    %13 = arith.mulf %12, %11 : vector<2x256xf32>
    %14 = math.tanh %13 : vector<2x256xf32>
    %cst_12 = arith.constant 5.000000e-01 : f32
    %15 = vector.broadcast %cst_12 : f32 to vector<2x256xf32>
    %16 = arith.mulf %15, %14 : vector<2x256xf32>
    %cst_13 = arith.constant 5.000000e-01 : f32
    %17 = vector.broadcast %cst_13 : f32 to vector<2x256xf32>
    %18 = arith.addf %16, %17 : vector<2x256xf32>
    %19 = vector.shape_cast %18 : vector<2x256xf32> to vector<2x1x256xf32>
    %20 = vector.broadcast %19 : vector<2x1x256xf32> to vector<2x4x256xf32>
    %21 = arith.mulf %0, %20 : vector<2x4x256xf32>
    %c0_14 = arith.constant 0 : index
    %c0_15 = arith.constant 0 : index
    %c0_16 = arith.constant 0 : index
    %22 = vector.load %arg4[%c0_14, %c0_15, %c0_16] : memref<2x4x256xf32, #tpu.memory_space<vmem>>, vector<2x4x256xf32>
    tpu.vector_store %arg4[%c0_14, %c0_15, %c0_16], %21 {strides = array<i32>} : memref<2x4x256xf32, #tpu.memory_space<vmem>>, vector<2x4x256xf32>,
    return
  }
  func.func @transform_0(%arg0: i32) -> (i32, i32, i32) {
    %c0_i32 = arith.constant 0 : i32
    %c0_i32_0 = arith.constant 0 : i32
    %c0_i32_1 = arith.constant 0 : i32
    return %arg0, %c0_i32, %c0_i32_0 : i32, i32, i32
  }
  func.func @transform_1(%arg0: i32) -> (i32, i32) {
    %c0_i32 = arith.constant 0 : i32
    %c0_i32_0 = arith.constant 0 : i32
    %c0_i32_1 = arith.constant 0 : i32
    return %c0_i32, %c0_i32_0 : i32, i32
  }
  func.func @transform_2(%arg0: i32) -> (i32, i32) {
    %c0_i32 = arith.constant 0 : i32
    %c0_i32_0 = arith.constant 0 : i32
    %c0_i32_1 = arith.constant 0 : i32
    return %c0_i32, %c0_i32_0 : i32, i32
  }
  func.func @transform_3(%arg0: i32) -> (i32, i32, i32) {
    %c0_i32 = arith.constant 0 : i32
    %c0_i32_0 = arith.constant 0 : i32
    %c0_i32_1 = arith.constant 0 : i32
    return %arg0, %c0_i32, %c0_i32_0 : i32, i32, i32
  }
}

</mosaic_0001>

<llo_original>
// kernel: tpu_custom_call.1
$region0: #{tpu_custom_call.1}
  #allocation0 [shape = 'u32[]', space=smem, size = 0x4, offset = 0x4, fixed_abs, tag = 'smem constant byte address 0x4 - core index']
  #allocation1 [shape = 'u32[144,128]{1,0:T(1,128)}', space=vmem, size = 0x12000, scoped, tag = 'internal scratch']
  %s0 = inlined_call_operand.hbm [shape: f32[2,4,256], index: 0, kind: input, shape index: {}]
  %s1 = inlined_call_operand.hbm [shape: f32[256,256], index: 1, kind: input, shape index: {}]
  %s2 = inlined_call_operand.hbm [shape: f32[256,256], index: 2, kind: input, shape index: {}]
  %s3 = inlined_call_operand.hbm [shape: f32[2,4,256], index: 3, kind: output, shape index: {}]
  %s4 = sld [smem:[#allocation0]]
  $region34: #{tpu_custom_call.1} parent=0
    _
  %s6 = ssub.s32 1, %s4
  %s7 = scalar_select 0, %s6, %s4
  $region1: #{tpu_custom_call.1} parent=0
    #allocation2 [shape = 'u8[8192]{0}', space=vmem, size = 0x2000, scoped, tag = 'input window, operand 0, single buffered']
    #allocation3 [shape = 's32[1]{0}', space=sflag, size = 0x4, scoped, tag = 'scoped memory for tpu_custom_call.1']
    #allocation4 [shape = 's32[1]{0}', space=sflag, size = 0x4, scoped, tag = 'scoped memory for tpu_custom_call.1']
    #allocation5 [shape = 'u8[262144]{0}', space=vmem, size = 0x40000, scoped, tag = 'input window, operand 1, single buffered']
    #allocation6 [shape = 's32[1]{0}', space=sflag, size = 0x4, scoped, tag = 'scoped memory for tpu_custom_call.1']
    #allocation7 [shape = 'u8[262144]{0}', space=vmem, size = 0x40000, scoped, tag = 'input window, operand 2, single buffered']
    #allocation8 [shape = 'u8[8192]{0}', space=vmem, size = 0x2000, scoped, tag = 'output window, operand 0, single buffered']
    %8 = vsyncpa [#allocation3], 0
    %9 = vsyncpa [#allocation6], 0
    %10 = vsyncpa [#allocation4], 0
    // Predicated region
    $region2: #{tpu_custom_call.1} parent=1 // pred_check
      _
    $region3: #{tpu_custom_call.1} parent=1 // pred_check_branch
      %12 = sbr.rel (0) target = $region5
    $region4: #{tpu_custom_call.1} parent=1 // pred_region
      %s14 = ssub.s32 256, 256
      %15 = vsyncadd [#allocation3], %s14
      %s16 = sshll.u32 [#allocation2], 4
      %s17 = int_to_ptr.vmem [resolvable:$true] %s16
      %22 = dma.hbm_to_vmem [thread:$0]  %s0, 256, %s17, [#allocation3], 128, 128, 8
    $region5: #{tpu_custom_call.1} parent=1 // pred_fallthru
      _
    // Predicated region
    $region6: #{tpu_custom_call.1} parent=1 // pred_check
      _
    $region7: #{tpu_custom_call.1} parent=1 // pred_check_branch
      %24 = sbr.rel (0) target = $region9
    $region8: #{tpu_custom_call.1} parent=1 // pred_region
      %s26 = ssub.s32 8192, 8192
      %27 = vsyncadd [#allocation6], %s26
      %s28 = sshll.u32 [#allocation5], 4
      %s29 = int_to_ptr.vmem [resolvable:$true] %s28
      %34 = dma.hbm_to_vmem [thread:$0]  %s1, 8192, %s29, [#allocation6], 256, 256, 16
    $region9: #{tpu_custom_call.1} parent=1 // pred_fallthru
      _
    // Predicated region
    $region10: #{tpu_custom_call.1} parent=1 // pred_check
      _
    $region11: #{tpu_custom_call.1} parent=1 // pred_check_branch
      %36 = sbr.rel (0) target = $region13
    $region12: #{tpu_custom_call.1} parent=1 // pred_region
      %s38 = ssub.s32 8192, 8192
      %39 = vsyncadd [#allocation6], %s38
      %s40 = sshll.u32 [#allocation7], 4
      %s41 = int_to_ptr.vmem [resolvable:$true] %s40
      %46 = dma.hbm_to_vmem [thread:$0]  %s2, 8192, %s41, [#allocation6], 256, 256, 16
    $region13: #{tpu_custom_call.1} parent=1 // pred_fallthru
      _
    // Predicated region
    $region14: #{tpu_custom_call.1} parent=1 // pred_check
      _
    $region15: #{tpu_custom_call.1} parent=1 // pred_check_branch
      %48 = sbr.rel (0) target = $region17
    $region16: #{tpu_custom_call.1} parent=1 // pred_region
      %49 = dma.done [#allocation3], 256
    $region17: #{tpu_custom_call.1} parent=1 // pred_fallthru
      _
    // Predicated region
    $region18: #{tpu_custom_call.1} parent=1 // pred_check
      _
    $region19: #{tpu_custom_call.1} parent=1 // pred_check_branch
      %51 = sbr.rel (0) target = $region21
    $region20: #{tpu_custom_call.1} parent=1 // pred_region
      %52 = dma.done [#allocation6], 8192
    $region21: #{tpu_custom_call.1} parent=1 // pred_fallthru
      _
    // Predicated region
    $region22: #{tpu_custom_call.1} parent=1 // pred_check
      _
    $region23: #{tpu_custom_call.1} parent=1 // pred_check_branch
      %54 = sbr.rel (0) target = $region25
    $region24: #{tpu_custom_call.1} parent=1 // pred_region
      %55 = dma.done [#allocation6], 8192
    $region25: #{tpu_custom_call.1} parent=1 // pred_fallthru
      _
    %v56 = vld [vmem:[#allocation2] sm:$0xff]
    %v57 = vld [vmem:[#allocation2 + $0x8] sm:$0xff]
    %v60 = vcombine.high %v56, %v56
    %v61 = vcombine.high %v57, %v57
    %vm64 = vcmask 1043456
    %v65 = vsel %vm64, %v56, 0.0
    %v66 = vrot.slane %v65, 4
    %v67 = vadd.f32 %v65, %v66
    %v68 = vrot.slane %v67, 2
    %v69 = vadd.f32 %v67, %v68
    %v70 = vrot.slane %v69, 1
    %v71 = vadd.f32 %v69, %v70
    %v72 = vsel %vm64, %v60, 0.0
    %v73 = vrot.slane %v72, 4
    %v74 = vadd.f32 %v72, %v73
    %v75 = vrot.slane %v74, 2
    %v76 = vadd.f32 %v74, %v75
    %v77 = vrot.slane %v76, 1
    %v78 = vadd.f32 %v76, %v77
    %v79 = vsel %vm64, %v57, 0.0
    %v80 = vrot.slane %v79, 4
    %v81 = vadd.f32 %v79, %v80
    %v82 = vrot.slane %v81, 2
    %v83 = vadd.f32 %v81, %v82
    %v84 = vrot.slane %v83, 1
    %v85 = vadd.f32 %v83, %v84
    %v86 = vsel %vm64, %v61, 0.0
    %v87 = vrot.slane %v86, 4
    %v88 = vadd.f32 %v86, %v87
    %v89 = vrot.slane %v88, 2
    %v90 = vadd.f32 %v88, %v89
    %v91 = vrot.slane %v90, 1
    %v92 = vadd.f32 %v90, %v91
    %v93 = vmul.f32 %v71, 0.25
    %v94 = vmul.f32 %v78, 0.25
    %v95 = vmul.f32 %v85, 0.25
    %v96 = vmul.f32 %v92, 0.25
    %v97 = vsel %vm64, %v56, -inf
    %v98 = vrot.slane %v97, 4
    %v99 = vmax.f32 %v97, %v98
    %v100 = vrot.slane %v99, 2
    %v101 = vmax.f32 %v99, %v100
    %v102 = vrot.slane %v101, 1
    %v103 = vmax.f32 %v101, %v102
    %v104 = vsel %vm64, %v60, -inf
    %v105 = vrot.slane %v104, 4
    %v106 = vmax.f32 %v104, %v105
    %v107 = vrot.slane %v106, 2
    %v108 = vmax.f32 %v106, %v107
    %v109 = vrot.slane %v108, 1
    %v110 = vmax.f32 %v108, %v109
    %v111 = vsel %vm64, %v57, -inf
    %v112 = vrot.slane %v111, 4
    %v113 = vmax.f32 %v111, %v112
    %v114 = vrot.slane %v113, 2
    %v115 = vmax.f32 %v113, %v114
    %v116 = vrot.slane %v115, 1
    %v117 = vmax.f32 %v115, %v116
    %v118 = vsel %vm64, %v61, -inf
    %v119 = vrot.slane %v118, 4
    %v120 = vmax.f32 %v118, %v119
    %v121 = vrot.slane %v120, 2
    %v122 = vmax.f32 %v120, %v121
    %v123 = vrot.slane %v122, 1
    %v124 = vmax.f32 %v122, %v123
    %v125 = vld [vmem:[#allocation5] sm:$0xff]
    %v126 = vld [vmem:[#allocation5 + $0x8] sm:$0xff]
    %v127 = vld [vmem:[#allocation5 + $0x10] sm:$0xff]
    %v128 = vld [vmem:[#allocation5 + $0x18] sm:$0xff]
    %v129 = vld [vmem:[#allocation5 + $0x20] sm:$0xff]
    %v130 = vld [vmem:[#allocation5 + $0x28] sm:$0xff]
    %v131 = vld [vmem:[#allocation5 + $0x30] sm:$0xff]
    %v132 = vld [vmem:[#allocation5 + $0x38] sm:$0xff]
    %v133 = vld [vmem:[#allocation5 + $0x40] sm:$0xff]
    %v134 = vld [vmem:[#allocation5 + $0x48] sm:$0xff]
    %v135 = vld [vmem:[#allocation5 + $0x50] sm:$0xff]
    %v136 = vld [vmem:[#allocation5 + $0x58] sm:$0xff]
    %v137 = vld [vmem:[#allocation5 + $0x60] sm:$0xff]
    %v138 = vld [vmem:[#allocation5 + $0x68] sm:$0xff]
    %v139 = vld [vmem:[#allocation5 + $0x70] sm:$0xff]
    %v140 = vld [vmem:[#allocation5 + $0x78] sm:$0xff]
    %v141 = vld [vmem:[#allocation5 + $0x80] sm:$0xff]
    %v142 = vld [vmem:[#allocation5 + $0x88] sm:$0xff]
    %v143 = vld [vmem:[#allocation5 + $0x90] sm:$0xff]
    %v144 = vld [vmem:[#allocation5 + $0x98] sm:$0xff]
    %v145 = vld [vmem:[#allocation5 + $0xa0] sm:$0xff]
    %v146 = vld [vmem:[#allocation5 + $0xa8] sm:$0xff]
    %v147 = vld [vmem:[#allocation5 + $0xb0] sm:$0xff]
    %v148 = vld [vmem:[#allocation5 + $0xb8] sm:$0xff]
    %v149 = vld [vmem:[#allocation5 + $0xc0] sm:$0xff]
    %v150 = vld [vmem:[#allocation5 + $0xc8] sm:$0xff]
    %v151 = vld [vmem:[#allocation5 + $0xd0] sm:$0xff]
    %v152 = vld [vmem:[#allocation5 + $0xd8] sm:$0xff]
    %v153 = vld [vmem:[#allocation5 + $0xe0] sm:$0xff]
    %v154 = vld [vmem:[#allocation5 + $0xe8] sm:$0xff]
    %v155 = vld [vmem:[#allocation5 + $0xf0] sm:$0xff]
    %v156 = vld [vmem:[#allocation5 + $0xf8] sm:$0xff]
    %v157 = vld [vmem:[#allocation5 + $0x100] sm:$0xff]
    %v158 = vld [vmem:[#allocation5 + $0x108] sm:$0xff]
    %v159 = vld [vmem:[#allocation5 + $0x110] sm:$0xff]
    %v160 = vld [vmem:[#allocation5 + $0x118] sm:$0xff]
    %v161 = vld [vmem:[#allocation5 + $0x120] sm:$0xff]
    %v162 = vld [vmem:[#allocation5 + $0x128] sm:$0xff]
    %v163 = vld [vmem:[#allocation5 + $0x130] sm:$0xff]
    %v164 = vld [vmem:[#allocation5 + $0x138] sm:$0xff]
    %v165 = vld [vmem:[#allocation5 + $0x140] sm:$0xff]
    %v166 = vld [vmem:[#allocation5 + $0x148] sm:$0xff]
    %v167 = vld [vmem:[#allocation5 + $0x150] sm:$0xff]
    %v168 = vld [vmem:[#allocation5 + $0x158] sm:$0xff]
    %v169 = vld [vmem:[#allocation5 + $0x160] sm:$0xff]
    %v170 = vld [vmem:[#allocation5 + $0x168] sm:$0xff]
    %v171 = vld [vmem:[#allocation5 + $0x170] sm:$0xff]
    %v172 = vld [vmem:[#allocation5 + $0x178] sm:$0xff]
    %v173 = vld [vmem:[#allocation5 + $0x180] sm:$0xff]
    %v174 = vld [vmem:[#allocation5 + $0x188] sm:$0xff]
    %v175 = vld [vmem:[#allocation5 + $0x190] sm:$0xff]
    %v176 = vld [vmem:[#allocation5 + $0x198] sm:$0xff]
    %v177 = vld [vmem:[#allocation5 + $0x1a0] sm:$0xff]
    %v178 = vld [vmem:[#allocation5 + $0x1a8] sm:$0xff]
    %v179 = vld [vmem:[#allocation5 + $0x1b0] sm:$0xff]
    %v180 = vld [vmem:[#allocation5 + $0x1b8] sm:$0xff]
    %v181 = vld [vmem:[#allocation5 + $0x1c0] sm:$0xff]
    %v182 = vld [vmem:[#allocation5 + $0x1c8] sm:$0xff]
    %v183 = vld [vmem:[#allocation5 + $0x1d0] sm:$0xff]
    %v184 = vld [vmem:[#allocation5 + $0x1d8] sm:$0xff]
    %v185 = vld [vmem:[#allocation5 + $0x1e0] sm:$0xff]
    %v186 = vld [vmem:[#allocation5 + $0x1e8] sm:$0xff]
    %v187 = vld [vmem:[#allocation5 + $0x1f0] sm:$0xff]
    %v188 = vld [vmem:[#allocation5 + $0x1f8] sm:$0xff]
    %v189 = vld [vmem:[#allocation7] sm:$0xff]
    %v190 = vld [vmem:[#allocation7 + $0x8] sm:$0xff]
    %v191 = vld [vmem:[#allocation7 + $0x10] sm:$0xff]
    %v192 = vld [vmem:[#allocation7 + $0x18] sm:$0xff]
    %v193 = vld [vmem:[#allocation7 + $0x20] sm:$0xff]
    %v194 = vld [vmem:[#allocation7 + $0x28] sm:$0xff]
    %v195 = vld [vmem:[#allocation7 + $0x30] sm:$0xff]
    %v196 = vld [vmem:[#allocation7 + $0x38] sm:$0xff]
    %v197 = vld [vmem:[#allocation7 + $0x40] sm:$0xff]
    %v198 = vld [vmem:[#allocation7 + $0x48] sm:$0xff]
    %v199 = vld [vmem:[#allocation7 + $0x50] sm:$0xff]
    %v200 = vld [vmem:[#allocation7 + $0x58] sm:$0xff]
    %v201 = vld [vmem:[#allocation7 + $0x60] sm:$0xff]
    %v202 = vld [vmem:[#allocation7 + $0x68] sm:$0xff]
    %v203 = vld [vmem:[#allocation7 + $0x70] sm:$0xff]
    %v204 = vld [vmem:[#allocation7 + $0x78] sm:$0xff]
    %v205 = vld [vmem:[#allocation7 + $0x80] sm:$0xff]
    %v206 = vld [vmem:[#allocation7 + $0x88] sm:$0xff]
    %v207 = vld [vmem:[#allocation7 + $0x90] sm:$0xff]
    %v208 = vld [vmem:[#allocation7 + $0x98] sm:$0xff]
    %v209 = vld [vmem:[#allocation7 + $0xa0] sm:$0xff]
    %v210 = vld [vmem:[#allocation7 + $0xa8] sm:$0xff]
    %v211 = vld [vmem:[#allocation7 + $0xb0] sm:$0xff]
    %v212 = vld [vmem:[#allocation7 + $0xb8] sm:$0xff]
    %v213 = vld [vmem:[#allocation7 + $0xc0] sm:$0xff]
    %v214 = vld [vmem:[#allocation7 + $0xc8] sm:$0xff]
    %v215 = vld [vmem:[#allocation7 + $0xd0] sm:$0xff]
    %v216 = vld [vmem:[#allocation7 + $0xd8] sm:$0xff]
    %v217 = vld [vmem:[#allocation7 + $0xe0] sm:$0xff]
    %v218 = vld [vmem:[#allocation7 + $0xe8] sm:$0xff]
    %v219 = vld [vmem:[#allocation7 + $0xf0] sm:$0xff]
    %v220 = vld [vmem:[#allocation7 + $0xf8] sm:$0xff]
    %v221 = vld [vmem:[#allocation7 + $0x100] sm:$0xff]
    %v222 = vld [vmem:[#allocation7 + $0x108] sm:$0xff]
    %v223 = vld [vmem:[#allocation7 + $0x110] sm:$0xff]
    %v224 = vld [vmem:[#allocation7 + $0x118] sm:$0xff]
    %v225 = vld [vmem:[#allocation7 + $0x120] sm:$0xff]
    %v226 = vld [vmem:[#allocation7 + $0x128] sm:$0xff]
    %v227 = vld [vmem:[#allocation7 + $0x130] sm:$0xff]
    %v228 = vld [vmem:[#allocation7 + $0x138] sm:$0xff]
    %v229 = vld [vmem:[#allocation7 + $0x140] sm:$0xff]
    %v230 = vld [vmem:[#allocation7 + $0x148] sm:$0xff]
    %v231 = vld [vmem:[#allocation7 + $0x150] sm:$0xff]
    %v232 = vld [vmem:[#allocation7 + $0x158] sm:$0xff]
    %v233 = vld [vmem:[#allocation7 + $0x160] sm:$0xff]
    %v234 = vld [vmem:[#allocation7 + $0x168] sm:$0xff]
    %v235 = vld [vmem:[#allocation7 + $0x170] sm:$0xff]
    %v236 = vld [vmem:[#allocation7 + $0x178] sm:$0xff]
    %v237 = vld [vmem:[#allocation7 + $0x180] sm:$0xff]
    %v238 = vld [vmem:[#allocation7 + $0x188] sm:$0xff]
    %v239 = vld [vmem:[#allocation7 + $0x190] sm:$0xff]
    %v240 = vld [vmem:[#allocation7 + $0x198] sm:$0xff]
    %v241 = vld [vmem:[#allocation7 + $0x1a0] sm:$0xff]
    %v242 = vld [vmem:[#allocation7 + $0x1a8] sm:$0xff]
    %v243 = vld [vmem:[#allocation7 + $0x1b0] sm:$0xff]
    %v244 = vld [vmem:[#allocation7 + $0x1b8] sm:$0xff]
    %v245 = vld [vmem:[#allocation7 + $0x1c0] sm:$0xff]
    %v246 = vld [vmem:[#allocation7 + $0x1c8] sm:$0xff]
    %v247 = vld [vmem:[#allocation7 + $0x1d0] sm:$0xff]
    %v248 = vld [vmem:[#allocation7 + $0x1d8] sm:$0xff]
    %v249 = vld [vmem:[#allocation7 + $0x1e0] sm:$0xff]
    %v250 = vld [vmem:[#allocation7 + $0x1e8] sm:$0xff]
    %v251 = vld [vmem:[#allocation7 + $0x1f0] sm:$0xff]
    %v252 = vld [vmem:[#allocation7 + $0x1f8] sm:$0xff]
    %vm257 = vcmask 1041409
    %v258 = vsel %vm257, %v117, %v103
    %v259 = vsel %vm257, %v124, %v110
    %262 = vmatprep.subr.mxu0 %v190
    %263 = vmatpush1.msra.mxu0 %v189
    %264 = vmatprep.subr.mxu0 %v192
    %265 = vmatpush1.msra.mxu0 %v191
    %266 = vmatprep.subr.mxu0 %v194
    %267 = vmatpush1.msra.mxu0 %v193
    %268 = vmatprep.subr.mxu0 %v196
    %269 = vmatpush1.msra.mxu0 %v195
    %270 = vmatprep.subr.mxu0 %v198
    %271 = vmatpush1.msra.mxu0 %v197
    %272 = vmatprep.subr.mxu0 %v200
    %273 = vmatpush1.msra.mxu0 %v199
    %274 = vmatprep.subr.mxu0 %v202
    %275 = vmatpush1.msra.mxu0 %v201
    %276 = vmatprep.subr.mxu0 %v204
    %277 = vmatpush1.msra.mxu0 %v203
    %278 = vmatprep.subr.mxu0 %v206
    %279 = vmatpush1.msra.mxu0 %v205
    %280 = vmatprep.subr.mxu0 %v208
    %281 = vmatpush1.msra.mxu0 %v207
    %282 = vmatprep.subr.mxu0 %v210
    %283 = vmatpush1.msra.mxu0 %v209
    %284 = vmatprep.subr.mxu0 %v212
    %285 = vmatpush1.msra.mxu0 %v211
    %286 = vmatprep.subr.mxu0 %v214
    %287 = vmatpush1.msra.mxu0 %v213
    %288 = vmatprep.subr.mxu0 %v216
    %289 = vmatpush1.msra.mxu0 %v215
    %290 = vmatprep.subr.mxu0 %v218
    %291 = vmatpush1.msra.mxu0 %v217
    %292 = vmatprep.subr.mxu0 %v220
    %293 = vmatpush1.msra.mxu0 %v219
    %294 = vmatprep.subr.mxu0 %v222
    %295 = vmatpush1.msra.mxu0 %v221
    %296 = vmatprep.subr.mxu0 %v224
    %297 = vmatpush1.msra.mxu0 %v223
    %298 = vmatprep.subr.mxu0 %v226
    %299 = vmatpush1.msra.mxu0 %v225
    %300 = vmatprep.subr.mxu0 %v228
    %301 = vmatpush1.msra.mxu0 %v227
    %302 = vmatprep.subr.mxu0 %v230
    %303 = vmatpush1.msra.mxu0 %v229
    %304 = vmatprep.subr.mxu0 %v232
    %305 = vmatpush1.msra.mxu0 %v231
    %306 = vmatprep.subr.mxu0 %v234
    %307 = vmatpush1.msra.mxu0 %v233
    %308 = vmatprep.subr.mxu0 %v236
    %309 = vmatpush1.msra.mxu0 %v235
    %310 = vmatprep.subr.mxu0 %v238
    %311 = vmatpush1.msra.mxu0 %v237
    %312 = vmatprep.subr.mxu0 %v240
    %313 = vmatpush1.msra.mxu0 %v239
    %314 = vmatprep.subr.mxu0 %v242
    %315 = vmatpush1.msra.mxu0 %v241
    %316 = vmatprep.subr.mxu0 %v244
    %317 = vmatpush1.msra.mxu0 %v243
    %318 = vmatprep.subr.mxu0 %v246
    %319 = vmatpush1.msra.mxu0 %v245
    %320 = vmatprep.subr.mxu0 %v248
    %321 = vmatpush1.msra.mxu0 %v247
    %322 = vmatprep.subr.mxu0 %v250
    %323 = vmatpush1.msra.mxu0 %v249
    %324 = vmatprep.subr.mxu0 %v252
    %325 = vmatpush1.msra.mxu0 %v251
    %326 = vmatprep.mubr.f32.mxu0 %v259
    %327 = vmatmul.mubr.f32.gmra.mrb[0].mxu0 %v258
    %v328 = vpop.f32.mrb[0].mxu0
    %v329 = vadd.f32 0.0, %v328
    %v330 = vpop.f32.mrb[0].mxu0
    %v331 = vadd.f32 0.0, %v330
    %332 = vdwg.mxu0
    %v337 = vsel %vm257, %v95, %v93
    %v338 = vsel %vm257, %v96, %v94
    %341 = vmatprep.subr.mxu0 %v126
    %342 = vmatpush1.msra.mxu0 %v125
    %343 = vmatprep.subr.mxu0 %v128
    %344 = vmatpush1.msra.mxu0 %v127
    %345 = vmatprep.subr.mxu0 %v130
    %346 = vmatpush1.msra.mxu0 %v129
    %347 = vmatprep.subr.mxu0 %v132
    %348 = vmatpush1.msra.mxu0 %v131
    %349 = vmatprep.subr.mxu0 %v134
    %350 = vmatpush1.msra.mxu0 %v133
    %351 = vmatprep.subr.mxu0 %v136
    %352 = vmatpush1.msra.mxu0 %v135
    %353 = vmatprep.subr.mxu0 %v138
    %354 = vmatpush1.msra.mxu0 %v137
    %355 = vmatprep.subr.mxu0 %v140
    %356 = vmatpush1.msra.mxu0 %v139
    %357 = vmatprep.subr.mxu0 %v142
    %358 = vmatpush1.msra.mxu0 %v141
    %359 = vmatprep.subr.mxu0 %v144
    %360 = vmatpush1.msra.mxu0 %v143
    %361 = vmatprep.subr.mxu0 %v146
    %362 = vmatpush1.msra.mxu0 %v145
    %363 = vmatprep.subr.mxu0 %v148
    %364 = vmatpush1.msra.mxu0 %v147
    %365 = vmatprep.subr.mxu0 %v150
    %366 = vmatpush1.msra.mxu0 %v149
    %367 = vmatprep.subr.mxu0 %v152
    %368 = vmatpush1.msra.mxu0 %v151
    %369 = vmatprep.subr.mxu0 %v154
    %370 = vmatpush1.msra.mxu0 %v153
    %371 = vmatprep.subr.mxu0 %v156
    %372 = vmatpush1.msra.mxu0 %v155
    %373 = vmatprep.subr.mxu0 %v158
    %374 = vmatpush1.msra.mxu0 %v157
    %375 = vmatprep.subr.mxu0 %v160
    %376 = vmatpush1.msra.mxu0 %v159
    %377 = vmatprep.subr.mxu0 %v162
    %378 = vmatpush1.msra.mxu0 %v161
    %379 = vmatprep.subr.mxu0 %v164
    %380 = vmatpush1.msra.mxu0 %v163
    %381 = vmatprep.subr.mxu0 %v166
    %382 = vmatpush1.msra.mxu0 %v165
    %383 = vmatprep.subr.mxu0 %v168
    %384 = vmatpush1.msra.mxu0 %v167
    %385 = vmatprep.subr.mxu0 %v170
    %386 = vmatpush1.msra.mxu0 %v169
    %387 = vmatprep.subr.mxu0 %v172
    %388 = vmatpush1.msra.mxu0 %v171
    %389 = vmatprep.subr.mxu0 %v174
    %390 = vmatpush1.msra.mxu0 %v173
    %391 = vmatprep.subr.mxu0 %v176
    %392 = vmatpush1.msra.mxu0 %v175
    %393 = vmatprep.subr.mxu0 %v178
    %394 = vmatpush1.msra.mxu0 %v177
    %395 = vmatprep.subr.mxu0 %v180
    %396 = vmatpush1.msra.mxu0 %v179
    %397 = vmatprep.subr.mxu0 %v182
    %398 = vmatpush1.msra.mxu0 %v181
    %399 = vmatprep.subr.mxu0 %v184
    %400 = vmatpush1.msra.mxu0 %v183
    %401 = vmatprep.subr.mxu0 %v186
    %402 = vmatpush1.msra.mxu0 %v185
    %403 = vmatprep.subr.mxu0 %v188
    %404 = vmatpush1.msra.mxu0 %v187
    %405 = vmatprep.mubr.f32.mxu0 %v338
    %406 = vmatmul.mubr.f32.gmra.mrb[0].mxu0 %v337
    %v407 = vpop.f32.mrb[0].mxu0
    %v408 = vadd.f32 %v329, %v407
    %v409 = vpop.f32.mrb[0].mxu0
    %v410 = vadd.f32 %v331, %v409
    %411 = vdwg.mxu0
    %v412 = vadd.f32 %v408, 0.0
    %v413 = vadd.f32 %v410, 0.0
    %v414 = vmul.f32 %v412, 0.5
    %v415 = vmul.f32 %v413, 0.5
    %v416 = vtanh.pop %v414
    %v417 = vtanh.pop %v415
    %v418 = vmul.f32 %v416, 0.5
    %v419 = vmul.f32 %v417, 0.5
    %v420 = vadd.f32 %v418, 0.5
    %v421 = vadd.f32 %v419, 0.5
    %v424 = vcombine.low %v420, %v421
    %v426 = vunpack.c.l.s4 1966171168
    %v427 = vunpack.c.0.s8 %v426
    %v428 = vlaneseq
    %v429 = vshrl.u32 %v428, 7
    %v430 = vsub.s32 %v427, %v429
    %v431 = vrot.slane %v424, %v430
    %v432 = vcombine.high %v431, %v431
    %v434 = vunpack.c.l.s4 1966171168
    %v435 = vunpack.c.0.s8 %v434
    %v436 = vlaneseq
    %v437 = vshrl.u32 %v436, 7
    %v438 = vsub.s32 %v435, %v437
    %v439 = vrot.slane %v431, %v438
    %v441 = vunpack.c.l.s4 1966171168
    %v442 = vunpack.c.0.s8 %v441
    %v443 = vlaneseq
    %v444 = vshrl.u32 %v443, 7
    %v445 = vsub.s32 %v442, %v444
    %v446 = vrot.slane %v432, %v445
    %v447 = vlaneseq
    %v448 = vshrl.u32 %v447, 7
    %v449 = vsub.s32 0, %v448
    %v450 = vrot.slane %v439, %v449
    %v451 = vlaneseq
    %v452 = vshrl.u32 %v451, 7
    %v453 = vsub.s32 1, %v452
    %v454 = vrot.slane %v439, %v453
    %v455 = vlaneseq
    %v456 = vshrl.u32 %v455, 7
    %v457 = vsub.s32 0, %v456
    %v458 = vrot.slane %v446, %v457
    %v459 = vlaneseq
    %v460 = vshrl.u32 %v459, 7
    %v461 = vsub.s32 1, %v460
    %v462 = vrot.slane %v446, %v461
    %v463 = vcombine.low %v450, %v454
    %v464 = vcombine.low %v458, %v462
    %v467 = vmul.f32 %v56, %v463
    %v468 = vmul.f32 %v57, %v464
    %469 = vst [vmem:[#allocation8] sm:$0xff] %v467
    %470 = vst [vmem:[#allocation8 + $0x8] sm:$0xff] %v468
    // Predicated region
    $region26: #{tpu_custom_call.1} parent=1 // pred_check
      _
    $region27: #{tpu_custom_call.1} parent=1 // pred_check_branch
      %472 = sbr.rel (0) target = $region29
    $region28: #{tpu_custom_call.1} parent=1 // pred_region
      %s474 = ssub.s32 256, 256
      %475 = vsyncadd [#allocation4], %s474
      %s476 = sshll.u32 [#allocation8], 4
      %s477 = int_to_ptr.vmem [resolvable:$true] %s476
      %482 = dma.vmem_to_hbm [thread:$0]  %s477, 256, %s3, [#allocation4], 128, 128, 8
    $region29: #{tpu_custom_call.1} parent=1 // pred_fallthru
      _
    // Predicated region
    $region30: #{tpu_custom_call.1} parent=1 // pred_check
      _
    $region31: #{tpu_custom_call.1} parent=1 // pred_check_branch
      %484 = sbr.rel (0) target = $region33
    $region32: #{tpu_custom_call.1} parent=1 // pred_region
      %485 = dma.done [#allocation4], 256
    $region33: #{tpu_custom_call.1} parent=1 // pred_fallthru
      _
    %486 = vsyncpa [#allocation3], 1
    %487 = vsyncpa [#allocation6], 1
    %488 = vsyncpa [#allocation4], 1

</llo_original>
